<compile_context>
chip_gen: v5e
topology: v5e:2x2
jax: 0.10.0
libtpu: 0.0.40
codegen_flags: <defaults>
</compile_context>

<pallas_src>
import functools

import jax
import jax.numpy as jnp
from jax.experimental import pallas as pl
from jax.experimental.pallas import tpu as pltpu


def _round_up(x, m):
    return ((x + m - 1) // m) * m


def _fusion_kernel(xv_ref, xs_ref, wv_ref, ws_ref, p_ref, o_ref, *, eps):
    # xv: (TB, Dv)  visual tile          xs: (TB, Ds)  state tile
    # wv: (Dv, Do)  weight rows (visual) ws: (Ds, Do)  weight rows (state)
    # p:  (3,  Do)  [bias; gamma; beta]  o:  (TB, Do)
    #
    # Row-split Linear: dot(concat([xv, xs]), W) == dot(xv, W[:Dv]) + dot(xs, W[Dv:]).
    acc = jnp.dot(xv_ref[...], wv_ref[...], preferred_element_type=jnp.float32)
    acc = acc + jnp.dot(xs_ref[...], ws_ref[...], preferred_element_type=jnp.float32)
    y = acc + p_ref[0:1, :].astype(jnp.float32)          # + bias

    # ReLU
    y = jnp.maximum(y, 0.0)

    # Dropout: identity in eval mode.

    # LayerNorm over the (unpadded) feature dim. E[y^2] - mean^2 form: both row
    # reductions issue back-to-back, no full-tile mask / centered-square chain.
    inv_d = 1.0 / float(y.shape[-1])
    sum_y = jnp.sum(y, axis=-1, keepdims=True)
    sum_y2 = jnp.sum(y * y, axis=-1, keepdims=True)
    mean = sum_y * inv_d
    var = jnp.maximum(sum_y2 * inv_d - mean * mean, 0.0)
    inv_std = jax.lax.rsqrt(var + eps)

    out = (y - mean) * inv_std * p_ref[1:2, :].astype(jnp.float32) \
        + p_ref[2:3, :].astype(jnp.float32)
    o_ref[...] = out.astype(o_ref.dtype)


def prepare_params(w, b, gamma, beta, visual_dim):
    """One-time parameter prep (hoisted out of the per-forward path)."""
    wv = w[:visual_dim]                       # (Dv, Do)
    ws = w[visual_dim:]                       # (Ds, Do)
    params = jnp.stack([b, gamma, beta], 0)   # (3,  Do)
    return wv, ws, params


def feature_fusion(visual_features, state_features, wv, ws, params, *,
                   eps=1e-5, block_b=None):
    """Fused concat + Linear + ReLU + (eval) Dropout + LayerNorm."""
    B, d_v = visual_features.shape
    Bs, d_s = state_features.shape
    assert B == Bs
    assert wv.shape[0] == d_v and ws.shape[0] == d_s
    d_out = wv.shape[1]
    assert ws.shape[1] == d_out and params.shape == (3, d_out)
    out_dtype = visual_features.dtype

    # ---- generation-aware VMEM budget ----
    try:
        vmem_cap = int(pltpu.get_tpu_info().vmem_capacity_bytes)
    except Exception:  # pragma: no cover - conservative fallback
        vmem_cap = 64 * 2**20
    if block_b is None:
        # v5e/v6e (128 MiB VMEM) take larger batch tiles than v7x (64 MiB per TC).
        block_b = 1024 if vmem_cap >= (100 << 20) else 512

    # ---- batch tiling: minimize padding; keep >=2 grid steps when B allows so the
    # "parallel" batch axis can shard across v7x's two TensorCores. ----
    itemsize = jnp.dtype(visual_features.dtype).itemsize
    sub = {4: 8, 2: 16, 1: 32}.get(itemsize, 8)   # sublane-dense tile rows per dtype
    n_steps = pl.cdiv(B, block_b)
    if B >= 2 * sub:
        n_steps = max(n_steps, 2)
    tb = min(_round_up(pl.cdiv(B, n_steps), sub), _round_up(B, sub))
    B_p = _round_up(B, tb)
    if B_p != B:
        rpad = B_p - B
        visual_features = jnp.pad(visual_features, ((0, rpad), (0, 0)))
        state_features = jnp.pad(state_features, ((0, rpad), (0, 0)))

    kernel = functools.partial(_fusion_kernel, eps=eps)

    def _nbytes(a):
        return a.size * jnp.dtype(a.dtype).itemsize

    # VMEM accounting: single-buffered resident params, double-buffered x/o tiles,
    # ~3 f32 (tb, d_out) epilogue temporaries (y, y*y, out).
    resident = _nbytes(wv) + _nbytes(ws) + _nbytes(params)
    x_block = tb * (d_v + d_s) * itemsize
    o_block = tb * d_out * jnp.dtype(out_dtype).itemsize
    f32_tmp = 3 * tb * d_out * 4
    vmem_needed = resident + 2 * x_block + 2 * o_block + f32_tmp
    vmem_limit = int(min(max(2 * vmem_needed, 32 * 2**20), int(0.75 * vmem_cap)))

    d_in = d_v + d_s
    cost = pl.CostEstimate(
        flops=2 * B_p * d_in * d_out + 8 * B_p * d_out,
        transcendentals=B_p,  # one rsqrt per row
        bytes_accessed=(_nbytes(visual_features) + _nbytes(state_features)
                        + resident + B_p * d_out * jnp.dtype(out_dtype).itemsize),
    )

    def _run(single_buffer_resident):
        if single_buffer_resident:
            def res_spec(shape):
                return pl.BlockSpec(shape, lambda i: (0, 0),
                                    pipeline_mode=pl.Buffered(1))
        else:
            def res_spec(shape):
                return pl.BlockSpec(shape, lambda i: (0, 0))

        return pl.pallas_call(
            kernel,
            out_shape=jax.ShapeDtypeStruct((B_p, d_out), out_dtype),
            grid_spec=pl.GridSpec(
                grid=(B_p // tb,),
                in_specs=[
                    pl.BlockSpec((tb, d_v), lambda i: (i, 0)),  # visual tile (streamed)
                    pl.BlockSpec((tb, d_s), lambda i: (i, 0)),  # state tile (streamed)
                    res_spec((d_v, d_out)),                     # W rows (visual), resident
                    res_spec((d_s, d_out)),                     # W rows (state), resident
                    res_spec((3, d_out)),                       # [bias; gamma; beta]
                ],
                out_specs=pl.BlockSpec((tb, d_out), lambda i: (i, 0)),
            ),
            compiler_params=pltpu.CompilerParams(
                dimension_semantics=("parallel",),
                vmem_limit_bytes=vmem_limit,
            ),
            cost_estimate=cost,
        )(visual_features, state_features, wv, ws, params)

    try:
        out_p = _run(True)
    except Exception:
        # Fallback: default double-buffering if pipeline_mode=Buffered(1) is unsupported.
        out_p = _run(False)

    if B_p != B:
        out_p = out_p[:B]
    return out_p


def _reference(visual_features, state_features, w, b, gamma, beta, eps=1e-5):
    x = jnp.concatenate([visual_features, state_features], axis=1)
    y = x @ w + b
    y = jnp.maximum(y, 0.0)
    mean = jnp.mean(y, axis=-1, keepdims=True)
    var = jnp.mean((y - mean) ** 2, axis=-1, keepdims=True)
    return (y - mean) / jnp.sqrt(var + eps) * gamma + beta


if __name__ == "__main__":
    key = jax.random.PRNGKey(0)
    k1, k2, k3, k4 = jax.random.split(key, 4)

    batch = 8
    visual_dim = 32
    state_dim = 16
    output_dim = 64
    d_in = visual_dim + state_dim

    visual = jax.random.normal(k1, (batch, visual_dim), dtype=jnp.float32)
    state = jax.random.normal(k2, (batch, state_dim), dtype=jnp.float32)

    # Deterministic parameter init (shapes follow nn.Linear / nn.LayerNorm).
    bound = 1.0 / jnp.sqrt(jnp.float32(d_in))
    w = jax.random.uniform(k3, (d_in, output_dim), minval=-bound, maxval=bound,
                           dtype=jnp.float32)
    b = jax.random.uniform(k4, (output_dim,), minval=-bound, maxval=bound,
                           dtype=jnp.float32)
    gamma = jnp.ones((output_dim,), dtype=jnp.float32)
    beta = jnp.zeros((output_dim,), dtype=jnp.float32)

    # Hoisted, one-time parameter prep (row-split weight + stacked LN params).
    wv, ws, params = prepare_params(w, b, gamma, beta, visual_dim)

    out = feature_fusion(visual, state, wv, ws, params)
    out = jax.block_until_ready(out)

    ref = _reference(visual, state, w, b, gamma, beta)
    assert out.shape == (batch, output_dim)
    assert jnp.allclose(out, ref, atol=1e-4, rtol=1e-4), "mismatch vs reference"

    print("KERNEL_OK")
</pallas_src>

<mosaic_0001>
module attributes {stable_mosaic.version = 11 : i64} {
  func.func @_fusion_kernel(%arg0: i32, %arg1: memref<8x32xf32, #tpu.memory_space<vmem>>, %arg2: memref<8x16xf32, #tpu.memory_space<vmem>>, %arg3: memref<32x64xf32, #tpu.memory_space<vmem>>, %arg4: memref<16x64xf32, #tpu.memory_space<vmem>>, %arg5: memref<3x64xf32, #tpu.memory_space<vmem>>, %arg6: memref<8x64xf32, #tpu.memory_space<vmem>>) attributes {dimension_semantics = [#tpu.dimension_semantics<parallel>], iteration_bounds = array<i64: 1>, scalar_prefetch = 0 : i64, scratch_operands = 0 : i64, tpu.core_type = #tpu.core_type<tc>, window_params = [{transform_indices = @transform_0, window_bounds = array<i64: 8, 32>}, {transform_indices = @transform_1, window_bounds = array<i64: 8, 16>}, {pipeline_mode = #tpu.pipeline_mode<synchronous>, transform_indices = @transform_2, window_bounds = array<i64: 32, 64>}, {pipeline_mode = #tpu.pipeline_mode<synchronous>, transform_indices = @transform_3, window_bounds = array<i64: 16, 64>}, {pipeline_mode = #tpu.pipeline_mode<synchronous>, transform_indices = @transform_4, window_bounds = array<i64: 3, 64>}, {transform_indices = @transform_5, window_bounds = array<i64: 8, 64>}]} {
    %c0 = arith.constant 0 : index
    %c0_0 = arith.constant 0 : index
    %0 = vector.load %arg1[%c0, %c0_0] : memref<8x32xf32, #tpu.memory_space<vmem>>, vector<8x32xf32>
    %c0_1 = arith.constant 0 : index
    %c0_2 = arith.constant 0 : index
    %1 = vector.load %arg3[%c0_1, %c0_2] : memref<32x64xf32, #tpu.memory_space<vmem>>, vector<32x64xf32>
    %cst = arith.constant dense<0.000000e+00> : vector<8x64xf32>
    %2 = tpu.matmul %0, %1, %cst {dimension_numbers = #tpu.dot_dimension_numbers<[1], [0], [0], [1], [0, 0, 1, 1], [], []>} : vector<8x32xf32>, vector<32x64xf32>, vector<8x64xf32> -> vector<8x64xf32>
    %c0_3 = arith.constant 0 : index
    %c0_4 = arith.constant 0 : index
    %3 = vector.load %arg2[%c0_3, %c0_4] : memref<8x16xf32, #tpu.memory_space<vmem>>, vector<8x16xf32>
    %c0_5 = arith.constant 0 : index
    %c0_6 = arith.constant 0 : index
    %4 = vector.load %arg4[%c0_5, %c0_6] : memref<16x64xf32, #tpu.memory_space<vmem>>, vector<16x64xf32>
    %cst_7 = arith.constant dense<0.000000e+00> : vector<8x64xf32>
    %5 = tpu.matmul %3, %4, %cst_7 {dimension_numbers = #tpu.dot_dimension_numbers<[1], [0], [0], [1], [0, 0, 1, 1], [], []>} : vector<8x16xf32>, vector<16x64xf32>, vector<8x64xf32> -> vector<8x64xf32>
    %6 = arith.addf %2, %5 : vector<8x64xf32>
    %c0_8 = arith.constant 0 : index
    %c0_9 = arith.constant 0 : index
    %7 = vector.load %arg5[%c0_8, %c0_9] : memref<3x64xf32, #tpu.memory_space<vmem>>, vector<1x64xf32>
    %8 = vector.broadcast %7 : vector<1x64xf32> to vector<8x64xf32>
    %9 = arith.addf %6, %8 : vector<8x64xf32>
    %cst_10 = arith.constant 0.000000e+00 : f32
    %10 = vector.broadcast %cst_10 : f32 to vector<8x64xf32>
    %11 = arith.maximumf %9, %10 : vector<8x64xf32>
    %cst_11 = arith.constant dense<0.000000e+00> : vector<8xf32>
    %12 = vector.multi_reduction <add>, %11, %cst_11 [1] : vector<8x64xf32> to vector<8xf32>
    %13 = vector.shape_cast %12 : vector<8xf32> to vector<8x1xf32>
    %14 = arith.mulf %11, %11 : vector<8x64xf32>
    %cst_12 = arith.constant dense<0.000000e+00> : vector<8xf32>
    %15 = vector.multi_reduction <add>, %14, %cst_12 [1] : vector<8x64xf32> to vector<8xf32>
    %16 = vector.shape_cast %15 : vector<8xf32> to vector<8x1xf32>
    %cst_13 = arith.constant 1.562500e-02 : f32
    %17 = vector.broadcast %cst_13 : f32 to vector<8x1xf32>
    %18 = arith.mulf %13, %17 : vector<8x1xf32>
    %cst_14 = arith.constant 1.562500e-02 : f32
    %19 = vector.broadcast %cst_14 : f32 to vector<8x1xf32>
    %20 = arith.mulf %16, %19 : vector<8x1xf32>
    %21 = arith.mulf %18, %18 : vector<8x1xf32>
    %22 = arith.subf %20, %21 : vector<8x1xf32>
    %cst_15 = arith.constant 0.000000e+00 : f32
    %23 = vector.broadcast %cst_15 : f32 to vector<8x1xf32>
    %24 = arith.maximumf %22, %23 : vector<8x1xf32>
    %cst_16 = arith.constant 9.99999974E-6 : f32
    %25 = vector.broadcast %cst_16 : f32 to vector<8x1xf32>
    %26 = arith.addf %24, %25 : vector<8x1xf32>
    %27 = math.rsqrt %26 : vector<8x1xf32>
    %28 = vector.broadcast %18 : vector<8x1xf32> to vector<8x64xf32>
    %29 = arith.subf %11, %28 : vector<8x64xf32>
    %30 = vector.broadcast %27 : vector<8x1xf32> to vector<8x64xf32>
    %31 = arith.mulf %29, %30 : vector<8x64xf32>
    %c1 = arith.constant 1 : index
    %c0_17 = arith.constant 0 : index
    %32 = vector.load %arg5[%c1, %c0_17] : memref<3x64xf32, #tpu.memory_space<vmem>>, vector<1x64xf32>
    %33 = vector.broadcast %32 : vector<1x64xf32> to vector<8x64xf32>
    %34 = arith.mulf %31, %33 : vector<8x64xf32>
    %c2 = arith.constant 2 : index
    %c0_18 = arith.constant 0 : index
    %35 = vector.load %arg5[%c2, %c0_18] : memref<3x64xf32, #tpu.memory_space<vmem>>, vector<1x64xf32>
    %36 = vector.broadcast %35 : vector<1x64xf32> to vector<8x64xf32>
    %37 = arith.addf %34, %36 : vector<8x64xf32>
    %c0_19 = arith.constant 0 : index
    %c0_20 = arith.constant 0 : index
    %38 = vector.load %arg6[%c0_19, %c0_20] : memref<8x64xf32, #tpu.memory_space<vmem>>, vector<8x64xf32>
    tpu.vector_store %arg6[%c0_19, %c0_20], %37 {strides = array<i32>} : memref<8x64xf32, #tpu.memory_space<vmem>>, vector<8x64xf32>,
    return
  }
  func.func @transform_0(%arg0: i32) -> (i32, i32) {
    %c0_i32 = arith.constant 0 : i32
    %c0_i32_0 = arith.constant 0 : i32
    return %arg0, %c0_i32 : i32, i32
  }
  func.func @transform_1(%arg0: i32) -> (i32, i32) {
    %c0_i32 = arith.constant 0 : i32
    %c0_i32_0 = arith.constant 0 : i32
    return %arg0, %c0_i32 : i32, i32
  }
  func.func @transform_2(%arg0: i32) -> (i32, i32) {
    %c0_i32 = arith.constant 0 : i32
    %c0_i32_0 = arith.constant 0 : i32
    %c0_i32_1 = arith.constant 0 : i32
    return %c0_i32, %c0_i32_0 : i32, i32
  }
  func.func @transform_3(%arg0: i32) -> (i32, i32) {
    %c0_i32 = arith.constant 0 : i32
    %c0_i32_0 = arith.constant 0 : i32
    %c0_i32_1 = arith.constant 0 : i32
    return %c0_i32, %c0_i32_0 : i32, i32
  }
  func.func @transform_4(%arg0: i32) -> (i32, i32) {
    %c0_i32 = arith.constant 0 : i32
    %c0_i32_0 = arith.constant 0 : i32
    %c0_i32_1 = arith.constant 0 : i32
    return %c0_i32, %c0_i32_0 : i32, i32
  }
  func.func @transform_5(%arg0: i32) -> (i32, i32) {
    %c0_i32 = arith.constant 0 : i32
    %c0_i32_0 = arith.constant 0 : i32
    return %arg0, %c0_i32 : i32, i32
  }
}

module attributes {stable_mosaic.version = 11 : i64} {
  func.func @_fusion_kernel(%arg0: i32, %arg1: memref<8x32xf32, #tpu.memory_space<vmem>>, %arg2: memref<8x16xf32, #tpu.memory_space<vmem>>, %arg3: memref<32x64xf32, #tpu.memory_space<vmem>>, %arg4: memref<16x64xf32, #tpu.memory_space<vmem>>, %arg5: memref<3x64xf32, #tpu.memory_space<vmem>>, %arg6: memref<8x64xf32, #tpu.memory_space<vmem>>) attributes {dimension_semantics = [#tpu.dimension_semantics<parallel>], iteration_bounds = array<i64: 1>, scalar_prefetch = 0 : i64, scratch_operands = 0 : i64, tpu.core_type = #tpu.core_type<tc>, window_params = [{transform_indices = @transform_0, window_bounds = array<i64: 8, 32>}, {transform_indices = @transform_1, window_bounds = array<i64: 8, 16>}, {pipeline_mode = #tpu.pipeline_mode<synchronous>, transform_indices = @transform_2, window_bounds = array<i64: 32, 64>}, {pipeline_mode = #tpu.pipeline_mode<synchronous>, transform_indices = @transform_3, window_bounds = array<i64: 16, 64>}, {pipeline_mode = #tpu.pipeline_mode<synchronous>, transform_indices = @transform_4, window_bounds = array<i64: 3, 64>}, {transform_indices = @transform_5, window_bounds = array<i64: 8, 64>}]} {
    %c0 = arith.constant 0 : index
    %c0_0 = arith.constant 0 : index
    %0 = vector.load %arg1[%c0, %c0_0] : memref<8x32xf32, #tpu.memory_space<vmem>>, vector<8x32xf32>
    %c0_1 = arith.constant 0 : index
    %c0_2 = arith.constant 0 : index
    %1 = vector.load %arg3[%c0_1, %c0_2] : memref<32x64xf32, #tpu.memory_space<vmem>>, vector<32x64xf32>
    %cst = arith.constant dense<0.000000e+00> : vector<8x64xf32>
    %2 = tpu.matmul %0, %1, %cst {dimension_numbers = #tpu.dot_dimension_numbers<[1], [0], [0], [1], [0, 0, 1, 1], [], []>} : vector<8x32xf32>, vector<32x64xf32>, vector<8x64xf32> -> vector<8x64xf32>
    %c0_3 = arith.constant 0 : index
    %c0_4 = arith.constant 0 : index
    %3 = vector.load %arg2[%c0_3, %c0_4] : memref<8x16xf32, #tpu.memory_space<vmem>>, vector<8x16xf32>
    %c0_5 = arith.constant 0 : index
    %c0_6 = arith.constant 0 : index
    %4 = vector.load %arg4[%c0_5, %c0_6] : memref<16x64xf32, #tpu.memory_space<vmem>>, vector<16x64xf32>
    %cst_7 = arith.constant dense<0.000000e+00> : vector<8x64xf32>
    %5 = tpu.matmul %3, %4, %cst_7 {dimension_numbers = #tpu.dot_dimension_numbers<[1], [0], [0], [1], [0, 0, 1, 1], [], []>} : vector<8x16xf32>, vector<16x64xf32>, vector<8x64xf32> -> vector<8x64xf32>
    %6 = arith.addf %2, %5 : vector<8x64xf32>
    %c0_8 = arith.constant 0 : index
    %c0_9 = arith.constant 0 : index
    %7 = vector.load %arg5[%c0_8, %c0_9] : memref<3x64xf32, #tpu.memory_space<vmem>>, vector<1x64xf32>
    %8 = vector.broadcast %7 : vector<1x64xf32> to vector<8x64xf32>
    %9 = arith.addf %6, %8 : vector<8x64xf32>
    %cst_10 = arith.constant 0.000000e+00 : f32
    %10 = vector.broadcast %cst_10 : f32 to vector<8x64xf32>
    %11 = arith.maximumf %9, %10 : vector<8x64xf32>
    %cst_11 = arith.constant dense<0.000000e+00> : vector<8xf32>
    %12 = vector.multi_reduction <add>, %11, %cst_11 [1] : vector<8x64xf32> to vector<8xf32>
    %13 = vector.shape_cast %12 : vector<8xf32> to vector<8x1xf32>
    %14 = arith.mulf %11, %11 : vector<8x64xf32>
    %cst_12 = arith.constant dense<0.000000e+00> : vector<8xf32>
    %15 = vector.multi_reduction <add>, %14, %cst_12 [1] : vector<8x64xf32> to vector<8xf32>
    %16 = vector.shape_cast %15 : vector<8xf32> to vector<8x1xf32>
    %cst_13 = arith.constant 1.562500e-02 : f32
    %17 = vector.broadcast %cst_13 : f32 to vector<8x1xf32>
    %18 = arith.mulf %13, %17 : vector<8x1xf32>
    %cst_14 = arith.constant 1.562500e-02 : f32
    %19 = vector.broadcast %cst_14 : f32 to vector<8x1xf32>
    %20 = arith.mulf %16, %19 : vector<8x1xf32>
    %21 = arith.mulf %18, %18 : vector<8x1xf32>
    %22 = arith.subf %20, %21 : vector<8x1xf32>
    %cst_15 = arith.constant 0.000000e+00 : f32
    %23 = vector.broadcast %cst_15 : f32 to vector<8x1xf32>
    %24 = arith.maximumf %22, %23 : vector<8x1xf32>
    %cst_16 = arith.constant 9.99999974E-6 : f32
    %25 = vector.broadcast %cst_16 : f32 to vector<8x1xf32>
    %26 = arith.addf %24, %25 : vector<8x1xf32>
    %27 = math.rsqrt %26 : vector<8x1xf32>
    %28 = vector.broadcast %18 : vector<8x1xf32> to vector<8x64xf32>
    %29 = arith.subf %11, %28 : vector<8x64xf32>
    %30 = vector.broadcast %27 : vector<8x1xf32> to vector<8x64xf32>
    %31 = arith.mulf %29, %30 : vector<8x64xf32>
    %c1 = arith.constant 1 : index
    %c0_17 = arith.constant 0 : index
    %32 = vector.load %arg5[%c1, %c0_17] : memref<3x64xf32, #tpu.memory_space<vmem>>, vector<1x64xf32>
    %33 = vector.broadcast %32 : vector<1x64xf32> to vector<8x64xf32>
    %34 = arith.mulf %31, %33 : vector<8x64xf32>
    %c2 = arith.constant 2 : index
    %c0_18 = arith.constant 0 : index
    %35 = vector.load %arg5[%c2, %c0_18] : memref<3x64xf32, #tpu.memory_space<vmem>>, vector<1x64xf32>
    %36 = vector.broadcast %35 : vector<1x64xf32> to vector<8x64xf32>
    %37 = arith.addf %34, %36 : vector<8x64xf32>
    %c0_19 = arith.constant 0 : index
    %c0_20 = arith.constant 0 : index
    %38 = vector.load %arg6[%c0_19, %c0_20] : memref<8x64xf32, #tpu.memory_space<vmem>>, vector<8x64xf32>
    tpu.vector_store %arg6[%c0_19, %c0_20], %37 {strides = array<i32>} : memref<8x64xf32, #tpu.memory_space<vmem>>, vector<8x64xf32>,
    return
  }
  func.func @transform_0(%arg0: i32) -> (i32, i32) {
    %c0_i32 = arith.constant 0 : i32
    %c0_i32_0 = arith.constant 0 : i32
    return %arg0, %c0_i32 : i32, i32
  }
  func.func @transform_1(%arg0: i32) -> (i32, i32) {
    %c0_i32 = arith.constant 0 : i32
    %c0_i32_0 = arith.constant 0 : i32
    return %arg0, %c0_i32 : i32, i32
  }
  func.func @transform_2(%arg0: i32) -> (i32, i32) {
    %c0_i32 = arith.constant 0 : i32
    %c0_i32_0 = arith.constant 0 : i32
    %c0_i32_1 = arith.constant 0 : i32
    return %c0_i32, %c0_i32_0 : i32, i32
  }
  func.func @transform_3(%arg0: i32) -> (i32, i32) {
    %c0_i32 = arith.constant 0 : i32
    %c0_i32_0 = arith.constant 0 : i32
    %c0_i32_1 = arith.constant 0 : i32
    return %c0_i32, %c0_i32_0 : i32, i32
  }
  func.func @transform_4(%arg0: i32) -> (i32, i32) {
    %c0_i32 = arith.constant 0 : i32
    %c0_i32_0 = arith.constant 0 : i32
    %c0_i32_1 = arith.constant 0 : i32
    return %c0_i32, %c0_i32_0 : i32, i32
  }
  func.func @transform_5(%arg0: i32) -> (i32, i32) {
    %c0_i32 = arith.constant 0 : i32
    %c0_i32_0 = arith.constant 0 : i32
    return %arg0, %c0_i32 : i32, i32
  }
}

</mosaic_0001>

<llo_original>
// kernel: tpu_custom_call.1
$region0: #{tpu_custom_call.1}
  #allocation0 [shape = 'u32[]', space=smem, size = 0x4, offset = 0x4, fixed_abs, tag = 'smem constant byte address 0x4 - core index']
  #allocation1 [shape = 'u32[72,128]{1,0:T(1,128)}', space=vmem, size = 0x9000, scoped, tag = 'internal scratch']
  %s0 = inlined_call_operand.hbm [shape: f32[8,32], index: 0, kind: input, shape index: {}]
  %s1 = inlined_call_operand.hbm [shape: f32[8,16], index: 1, kind: input, shape index: {}]
  %s2 = inlined_call_operand.hbm [shape: f32[32,64], index: 2, kind: input, shape index: {}]
  %s3 = inlined_call_operand.hbm [shape: f32[16,64], index: 3, kind: input, shape index: {}]
  %s4 = inlined_call_operand.hbm [shape: f32[3,64], index: 4, kind: input, shape index: {}]
  %s5 = inlined_call_operand.hbm [shape: f32[8,64], index: 5, kind: output, shape index: {}]
  %s6 = sld [smem:[#allocation0]]
  $region50: #{tpu_custom_call.1} parent=0
    _
  %s8 = ssub.s32 1, %s6
  %s9 = scalar_select 0, %s8, %s6
  $region1: #{tpu_custom_call.1} parent=0
    #allocation2 [shape = 'u8[4096]{0}', space=vmem, size = 0x1000, scoped, tag = 'input window, operand 0, single buffered']
    #allocation3 [shape = 's32[1]{0}', space=sflag, size = 0x4, scoped, tag = 'scoped memory for tpu_custom_call.1']
    #allocation4 [shape = 's32[1]{0}', space=sflag, size = 0x4, scoped, tag = 'scoped memory for tpu_custom_call.1']
    #allocation5 [shape = 'u8[4096]{0}', space=vmem, size = 0x1000, scoped, tag = 'input window, operand 1, single buffered']
    #allocation6 [shape = 's32[1]{0}', space=sflag, size = 0x4, scoped, tag = 'scoped memory for tpu_custom_call.1']
    #allocation7 [shape = 'u8[16384]{0}', space=vmem, size = 0x4000, scoped, tag = 'input window, operand 2, single buffered']
    #allocation8 [shape = 'u8[8192]{0}', space=vmem, size = 0x2000, scoped, tag = 'input window, operand 3, single buffered']
    #allocation9 [shape = 's32[1]{0}', space=sflag, size = 0x4, scoped, tag = 'scoped memory for tpu_custom_call.1']
    #allocation10 [shape = 'u8[2048]{0}', space=vmem, size = 0x800, scoped, tag = 'input window, operand 4, single buffered']
    #allocation11 [shape = 'u8[4096]{0}', space=vmem, size = 0x1000, scoped, tag = 'output window, operand 0, single buffered']
    %10 = vsyncpa [#allocation3], 0
    %11 = vsyncpa [#allocation6], 0
    %12 = vsyncpa [#allocation9], 0
    %13 = vsyncpa [#allocation4], 0
    // Predicated region
    $region2: #{tpu_custom_call.1} parent=1 // pred_check
      _
    $region3: #{tpu_custom_call.1} parent=1 // pred_check_branch
      %15 = sbr.rel (0) target = $region5
    $region4: #{tpu_custom_call.1} parent=1 // pred_region
      %17 = vsyncadd [#allocation3], 0
      %s19 = sshll.u32 %s0, 4
      %s20 = int_to_ptr.hbm [resolvable:$true] %s19
      %s21 = sshll.u32 [#allocation2], 4
      %s22 = int_to_ptr.vmem [resolvable:$true] %s21
      %24 = dma.hbm_to_vmem [thread:$0]  %s20, 128, %s22, [#allocation3]
    $region5: #{tpu_custom_call.1} parent=1 // pred_fallthru
      _
    // Predicated region
    $region6: #{tpu_custom_call.1} parent=1 // pred_check
      _
    $region7: #{tpu_custom_call.1} parent=1 // pred_check_branch
      %26 = sbr.rel (0) target = $region9
    $region8: #{tpu_custom_call.1} parent=1 // pred_region
      %28 = vsyncadd [#allocation6], 0
      %s30 = sshll.u32 %s1, 4
      %s31 = int_to_ptr.hbm [resolvable:$true] %s30
      %s32 = sshll.u32 [#allocation5], 4
      %s33 = int_to_ptr.vmem [resolvable:$true] %s32
      %35 = dma.hbm_to_vmem [thread:$0]  %s31, 128, %s33, [#allocation6]
    $region9: #{tpu_custom_call.1} parent=1 // pred_fallthru
      _
    // Predicated region
    $region10: #{tpu_custom_call.1} parent=1 // pred_check
      _
    $region11: #{tpu_custom_call.1} parent=1 // pred_check_branch
      %37 = sbr.rel (0) target = $region13
    $region12: #{tpu_custom_call.1} parent=1 // pred_region
      %39 = vsyncadd [#allocation6], 0
      %s40 = sshll.u32 %s2, 4
      %s41 = int_to_ptr.hbm [resolvable:$true] %s40
      %s42 = sshll.u32 [#allocation7], 4
      %s43 = int_to_ptr.vmem [resolvable:$true] %s42
      %48 = dma.hbm_to_vmem [thread:$0]  %s41, 512, %s43, [#allocation6], 128, 128, 8
    $region13: #{tpu_custom_call.1} parent=1 // pred_fallthru
      _
    // Predicated region
    $region14: #{tpu_custom_call.1} parent=1 // pred_check
      _
    $region15: #{tpu_custom_call.1} parent=1 // pred_check_branch
      %50 = sbr.rel (0) target = $region17
    $region16: #{tpu_custom_call.1} parent=1 // pred_region
      %52 = vsyncadd [#allocation9], 0
      %s53 = sshll.u32 %s3, 4
      %s54 = int_to_ptr.hbm [resolvable:$true] %s53
      %s55 = sshll.u32 [#allocation8], 4
      %s56 = int_to_ptr.vmem [resolvable:$true] %s55
      %61 = dma.hbm_to_vmem [thread:$0]  %s54, 256, %s56, [#allocation9], 128, 128, 8
    $region17: #{tpu_custom_call.1} parent=1 // pred_fallthru
      _
    // Predicated region
    $region18: #{tpu_custom_call.1} parent=1 // pred_check
      _
    $region19: #{tpu_custom_call.1} parent=1 // pred_check_branch
      %63 = sbr.rel (0) target = $region21
    $region20: #{tpu_custom_call.1} parent=1 // pred_region
      %65 = vsyncadd [#allocation9], 0
      %s67 = sshll.u32 %s4, 4
      %s68 = int_to_ptr.hbm [resolvable:$true] %s67
      %s69 = sshll.u32 [#allocation10], 4
      %s70 = int_to_ptr.vmem [resolvable:$true] %s69
      %72 = dma.hbm_to_vmem [thread:$0]  %s68, 64, %s70, [#allocation9]
    $region21: #{tpu_custom_call.1} parent=1 // pred_fallthru
      _
    // Predicated region
    $region22: #{tpu_custom_call.1} parent=1 // pred_check
      _
    $region23: #{tpu_custom_call.1} parent=1 // pred_check_branch
      %74 = sbr.rel (0) target = $region25
    $region24: #{tpu_custom_call.1} parent=1 // pred_region
      %76 = dma.done [#allocation3], 128
    $region25: #{tpu_custom_call.1} parent=1 // pred_fallthru
      _
    // Predicated region
    $region26: #{tpu_custom_call.1} parent=1 // pred_check
      _
    $region27: #{tpu_custom_call.1} parent=1 // pred_check_branch
      %78 = sbr.rel (0) target = $region29
    $region28: #{tpu_custom_call.1} parent=1 // pred_region
      %80 = dma.done [#allocation6], 128
    $region29: #{tpu_custom_call.1} parent=1 // pred_fallthru
      _
    // Predicated region
    $region30: #{tpu_custom_call.1} parent=1 // pred_check
      _
    $region31: #{tpu_custom_call.1} parent=1 // pred_check_branch
      %82 = sbr.rel (0) target = $region33
    $region32: #{tpu_custom_call.1} parent=1 // pred_region
      %84 = dma.done [#allocation6], 512
    $region33: #{tpu_custom_call.1} parent=1 // pred_fallthru
      _
    // Predicated region
    $region34: #{tpu_custom_call.1} parent=1 // pred_check
      _
    $region35: #{tpu_custom_call.1} parent=1 // pred_check_branch
      %86 = sbr.rel (0) target = $region37
    $region36: #{tpu_custom_call.1} parent=1 // pred_region
      %88 = dma.done [#allocation9], 256
    $region37: #{tpu_custom_call.1} parent=1 // pred_fallthru
      _
    // Predicated region
    $region38: #{tpu_custom_call.1} parent=1 // pred_check
      _
    $region39: #{tpu_custom_call.1} parent=1 // pred_check_branch
      %90 = sbr.rel (0) target = $region41
    $region40: #{tpu_custom_call.1} parent=1 // pred_region
      %92 = dma.done [#allocation9], 64
    $region41: #{tpu_custom_call.1} parent=1 // pred_fallthru
      _
    %v93 = vld [vmem:[#allocation2] sm:$0xff]
    %v94 = vld [vmem:[#allocation7] sm:$0xff]
    %v95 = vld [vmem:[#allocation7 + $0x8] sm:$0xff]
    %v96 = vld [vmem:[#allocation7 + $0x10] sm:$0xff]
    %v97 = vld [vmem:[#allocation7 + $0x18] sm:$0xff]
    %v98 = vld [vmem:[#allocation5] sm:$0xff]
    %v99 = vld [vmem:[#allocation8] sm:$0xff]
    %v100 = vld [vmem:[#allocation8 + $0x8] sm:$0xff]
    %vm101 = vcmask 130048
    %v103 = vsel %vm101, %v98, 0
    %105 = vmatpush.msra.mxu0 0.0
    %106 = vmatpush.msra.mxu0 0.0
    %107 = vmatpush.msra.mxu0 0.0
    %108 = vmatpush.msra.mxu0 0.0
    %109 = vmatpush.msra.mxu0 0.0
    %110 = vmatpush.msra.mxu0 0.0
    %111 = vmatpush.msra.mxu0 0.0
    %112 = vmatpush.msra.mxu0 0.0
    %113 = vmatpush.msra.mxu0 0.0
    %114 = vmatpush.msra.mxu0 0.0
    %115 = vmatpush.msra.mxu0 0.0
    %116 = vmatpush.msra.mxu0 0.0
    %117 = vmatpush.msra.mxu0 0.0
    %118 = vmatpush.msra.mxu0 0.0
    %119 = vmatpush.msra.mxu0 %v100
    %120 = vmatpush.msra.mxu0 %v99
    %121 = vmatmul.f32.gmra.mxu0 %v103
    %v122 = vpop.f32.mrf.mxu0
    %v123 = vadd.f32 0.0, %v122
    %124 = vdwg.mxu0
    %vm125 = vcmask 261120
    %v127 = vsel %vm125, %v93, 0
    %129 = vmatpush.msra.mxu0 0.0
    %130 = vmatpush.msra.mxu0 0.0
    %131 = vmatpush.msra.mxu0 0.0
    %132 = vmatpush.msra.mxu0 0.0
    %133 = vmatpush.msra.mxu0 0.0
    %134 = vmatpush.msra.mxu0 0.0
    %135 = vmatpush.msra.mxu0 0.0
    %136 = vmatpush.msra.mxu0 0.0
    %137 = vmatpush.msra.mxu0 0.0
    %138 = vmatpush.msra.mxu0 0.0
    %139 = vmatpush.msra.mxu0 0.0
    %140 = vmatpush.msra.mxu0 0.0
    %141 = vmatpush.msra.mxu0 %v97
    %142 = vmatpush.msra.mxu0 %v96
    %143 = vmatpush.msra.mxu0 %v95
    %144 = vmatpush.msra.mxu0 %v94
    %145 = vmatmul.f32.gmra.mxu0 %v127
    %v146 = vpop.f32.mrf.mxu0
    %v147 = vadd.f32 %v123, %v146
    %148 = vdwg.mxu0
    %v149 = vld [vmem:[#allocation10] sm:$0x1]
    %v150 = vperm.slane %v149, 0
    %v151 = vadd.f32 %v147, %v150
    %v152 = vmax.f32 %v151, 0.0
    %vm153 = vcmask 523264
    %v154 = vsel %vm153, %v152, 0.0
    %155 = vadd.xlane.f32.xlu0 %v154
    %v156 = vpop.xlane.xlu0 %155
    %v157 = vmul.f32 %v152, %v152
    %v158 = vsel %vm153, %v157, 0.0
    %159 = vadd.xlane.f32.xlu0 %v158
    %v160 = vpop.xlane.xlu0 %159
    %v161 = vmul.f32 %v156, 0.015625
    %v162 = vmul.f32 %v160, 0.015625
    %v163 = vmul.f32 %v161, %v161
    %v164 = vsub.f32 %v162, %v163
    %v165 = vmax.f32 %v164, 0.0
    %v166 = vadd.f32 %v165, 1e-05
    %v167 = vrsqrt.pop %v166
    %v168 = vmul.f32 %v167, %v166
    %v169 = vmul.f32 %v168, %v167
    %v170 = vmul.f32 0.5, %v169
    %v171 = vsub.f32 1.5, %v170
    %v172 = vmul.f32 %v167, %v171
    %vm173 = vweird.f32 %v166
    %vm174 = vweird.f32 %v167
    %vm175 = vmor %vm173, %vm174
    %v176 = vsel %vm175, %v167, %v172
    %v177 = vsub.f32 %v152, %v161
    %v178 = vmul.f32 %v177, %v176
    %v179 = vld [vmem:[#allocation10 + $0x1] sm:$0x1]
    %v180 = vperm.slane %v179, 0
    %v181 = vmul.f32 %v178, %v180
    %v182 = vld [vmem:[#allocation10 + $0x2] sm:$0x1]
    %v183 = vperm.slane %v182, 0
    %v184 = vadd.f32 %v181, %v183
    %185 = vst.msk [vmem:[#allocation11] sm:$0xff] %vm153, %v184
    // Predicated region
    $region42: #{tpu_custom_call.1} parent=1 // pred_check
      _
    $region43: #{tpu_custom_call.1} parent=1 // pred_check_branch
      %187 = sbr.rel (0) target = $region45
    $region44: #{tpu_custom_call.1} parent=1 // pred_region
      %189 = vsyncadd [#allocation4], 0
      %s191 = sshll.u32 [#allocation11], 4
      %s192 = int_to_ptr.vmem [resolvable:$true] %s191
      %s193 = sshll.u32 %s5, 4
      %s194 = int_to_ptr.hbm [resolvable:$true] %s193
      %196 = dma.vmem_to_hbm [thread:$0]  %s192, 128, %s194, [#allocation4]
    $region45: #{tpu_custom_call.1} parent=1 // pred_fallthru
      _
    // Predicated region
    $region46: #{tpu_custom_call.1} parent=1 // pred_check
      _
    $region47: #{tpu_custom_call.1} parent=1 // pred_check_branch
      %198 = sbr.rel (0) target = $region49
    $region48: #{tpu_custom_call.1} parent=1 // pred_region
      %200 = dma.done [#allocation4], 128
    $region49: #{tpu_custom_call.1} parent=1 // pred_fallthru
      _
    %201 = vsyncpa [#allocation3], 1
    %202 = vsyncpa [#allocation6], 1
    %203 = vsyncpa [#allocation9], 1
    %204 = vsyncpa [#allocation4], 1

// kernel: tpu_custom_call.1
$region0: #{tpu_custom_call.1}
  #allocation0 [shape = 'u32[]', space=smem, size = 0x4, offset = 0x4, fixed_abs, tag = 'smem constant byte address 0x4 - core index']
  #allocation1 [shape = 'u32[72,128]{1,0:T(1,128)}', space=vmem, size = 0x9000, scoped, tag = 'internal scratch']
  %s0 = inlined_call_operand.hbm [shape: f32[8,32], index: 0, kind: input, shape index: {}]
  %s1 = inlined_call_operand.hbm [shape: f32[8,16], index: 1, kind: input, shape index: {}]
  %s2 = inlined_call_operand.hbm [shape: f32[32,64], index: 2, kind: input, shape index: {}]
  %s3 = inlined_call_operand.hbm [shape: f32[16,64], index: 3, kind: input, shape index: {}]
  %s4 = inlined_call_operand.hbm [shape: f32[3,64], index: 4, kind: input, shape index: {}]
  %s5 = inlined_call_operand.hbm [shape: f32[8,64], index: 5, kind: output, shape index: {}]
  %s6 = sld [smem:[#allocation0]]
  $region50: #{tpu_custom_call.1} parent=0
    _
  %s8 = ssub.s32 1, %s6
  %s9 = scalar_select 0, %s8, %s6
  $region1: #{tpu_custom_call.1} parent=0
    #allocation2 [shape = 'u8[4096]{0}', space=vmem, size = 0x1000, scoped, tag = 'input window, operand 0, single buffered']
    #allocation3 [shape = 's32[1]{0}', space=sflag, size = 0x4, scoped, tag = 'scoped memory for tpu_custom_call.1']
    #allocation4 [shape = 's32[1]{0}', space=sflag, size = 0x4, scoped, tag = 'scoped memory for tpu_custom_call.1']
    #allocation5 [shape = 'u8[4096]{0}', space=vmem, size = 0x1000, scoped, tag = 'input window, operand 1, single buffered']
    #allocation6 [shape = 's32[1]{0}', space=sflag, size = 0x4, scoped, tag = 'scoped memory for tpu_custom_call.1']
    #allocation7 [shape = 'u8[16384]{0}', space=vmem, size = 0x4000, scoped, tag = 'input window, operand 2, single buffered']
    #allocation8 [shape = 'u8[8192]{0}', space=vmem, size = 0x2000, scoped, tag = 'input window, operand 3, single buffered']
    #allocation9 [shape = 's32[1]{0}', space=sflag, size = 0x4, scoped, tag = 'scoped memory for tpu_custom_call.1']
    #allocation10 [shape = 'u8[2048]{0}', space=vmem, size = 0x800, scoped, tag = 'input window, operand 4, single buffered']
    #allocation11 [shape = 'u8[4096]{0}', space=vmem, size = 0x1000, scoped, tag = 'output window, operand 0, single buffered']
    %10 = vsyncpa [#allocation3], 0
    %11 = vsyncpa [#allocation6], 0
    %12 = vsyncpa [#allocation9], 0
    %13 = vsyncpa [#allocation4], 0
    // Predicated region
    $region2: #{tpu_custom_call.1} parent=1 // pred_check
      _
    $region3: #{tpu_custom_call.1} parent=1 // pred_check_branch
      %15 = sbr.rel (0) target = $region5
    $region4: #{tpu_custom_call.1} parent=1 // pred_region
      %17 = vsyncadd [#allocation3], 0
      %s19 = sshll.u32 %s0, 4
      %s20 = int_to_ptr.hbm [resolvable:$true] %s19
      %s21 = sshll.u32 [#allocation2], 4
      %s22 = int_to_ptr.vmem [resolvable:$true] %s21
      %24 = dma.hbm_to_vmem [thread:$0]  %s20, 128, %s22, [#allocation3]
    $region5: #{tpu_custom_call.1} parent=1 // pred_fallthru
      _
    // Predicated region
    $region6: #{tpu_custom_call.1} parent=1 // pred_check
      _
    $region7: #{tpu_custom_call.1} parent=1 // pred_check_branch
      %26 = sbr.rel (0) target = $region9
    $region8: #{tpu_custom_call.1} parent=1 // pred_region
      %28 = vsyncadd [#allocation6], 0
      %s30 = sshll.u32 %s1, 4
      %s31 = int_to_ptr.hbm [resolvable:$true] %s30
      %s32 = sshll.u32 [#allocation5], 4
      %s33 = int_to_ptr.vmem [resolvable:$true] %s32
      %35 = dma.hbm_to_vmem [thread:$0]  %s31, 128, %s33, [#allocation6]
    $region9: #{tpu_custom_call.1} parent=1 // pred_fallthru
      _
    // Predicated region
    $region10: #{tpu_custom_call.1} parent=1 // pred_check
      _
    $region11: #{tpu_custom_call.1} parent=1 // pred_check_branch
      %37 = sbr.rel (0) target = $region13
    $region12: #{tpu_custom_call.1} parent=1 // pred_region
      %39 = vsyncadd [#allocation6], 0
      %s40 = sshll.u32 %s2, 4
      %s41 = int_to_ptr.hbm [resolvable:$true] %s40
      %s42 = sshll.u32 [#allocation7], 4
      %s43 = int_to_ptr.vmem [resolvable:$true] %s42
      %48 = dma.hbm_to_vmem [thread:$0]  %s41, 512, %s43, [#allocation6], 128, 128, 8
    $region13: #{tpu_custom_call.1} parent=1 // pred_fallthru
      _
    // Predicated region
    $region14: #{tpu_custom_call.1} parent=1 // pred_check
      _
    $region15: #{tpu_custom_call.1} parent=1 // pred_check_branch
      %50 = sbr.rel (0) target = $region17
    $region16: #{tpu_custom_call.1} parent=1 // pred_region
      %52 = vsyncadd [#allocation9], 0
      %s53 = sshll.u32 %s3, 4
      %s54 = int_to_ptr.hbm [resolvable:$true] %s53
      %s55 = sshll.u32 [#allocation8], 4
      %s56 = int_to_ptr.vmem [resolvable:$true] %s55
      %61 = dma.hbm_to_vmem [thread:$0]  %s54, 256, %s56, [#allocation9], 128, 128, 8
    $region17: #{tpu_custom_call.1} parent=1 // pred_fallthru
      _
    // Predicated region
    $region18: #{tpu_custom_call.1} parent=1 // pred_check
      _
    $region19: #{tpu_custom_call.1} parent=1 // pred_check_branch
      %63 = sbr.rel (0) target = $region21
    $region20: #{tpu_custom_call.1} parent=1 // pred_region
      %65 = vsyncadd [#allocation9], 0
      %s67 = sshll.u32 %s4, 4
      %s68 = int_to_ptr.hbm [resolvable:$true] %s67
      %s69 = sshll.u32 [#allocation10], 4
      %s70 = int_to_ptr.vmem [resolvable:$true] %s69
      %72 = dma.hbm_to_vmem [thread:$0]  %s68, 64, %s70, [#allocation9]
    $region21: #{tpu_custom_call.1} parent=1 // pred_fallthru
      _
    // Predicated region
    $region22: #{tpu_custom_call.1} parent=1 // pred_check
      _
    $region23: #{tpu_custom_call.1} parent=1 // pred_check_branch
      %74 = sbr.rel (0) target = $region25
    $region24: #{tpu_custom_call.1} parent=1 // pred_region
      %76 = dma.done [#allocation3], 128
    $region25: #{tpu_custom_call.1} parent=1 // pred_fallthru
      _
    // Predicated region
    $region26: #{tpu_custom_call.1} parent=1 // pred_check
      _
    $region27: #{tpu_custom_call.1} parent=1 // pred_check_branch
      %78 = sbr.rel (0) target = $region29
    $region28: #{tpu_custom_call.1} parent=1 // pred_region
      %80 = dma.done [#allocation6], 128
    $region29: #{tpu_custom_call.1} parent=1 // pred_fallthru
      _
    // Predicated region
    $region30: #{tpu_custom_call.1} parent=1 // pred_check
      _
    $region31: #{tpu_custom_call.1} parent=1 // pred_check_branch
      %82 = sbr.rel (0) target = $region33
    $region32: #{tpu_custom_call.1} parent=1 // pred_region
      %84 = dma.done [#allocation6], 512
    $region33: #{tpu_custom_call.1} parent=1 // pred_fallthru
      _
    // Predicated region
    $region34: #{tpu_custom_call.1} parent=1 // pred_check
      _
    $region35: #{tpu_custom_call.1} parent=1 // pred_check_branch
      %86 = sbr.rel (0) target = $region37
    $region36: #{tpu_custom_call.1} parent=1 // pred_region
      %88 = dma.done [#allocation9], 256
    $region37: #{tpu_custom_call.1} parent=1 // pred_fallthru
      _
    // Predicated region
    $region38: #{tpu_custom_call.1} parent=1 // pred_check
      _
    $region39: #{tpu_custom_call.1} parent=1 // pred_check_branch
      %90 = sbr.rel (0) target = $region41
    $region40: #{tpu_custom_call.1} parent=1 // pred_region
      %92 = dma.done [#allocation9], 64
    $region41: #{tpu_custom_call.1} parent=1 // pred_fallthru
      _
    %v93 = vld [vmem:[#allocation2] sm:$0xff]
    %v94 = vld [vmem:[#allocation7] sm:$0xff]
    %v95 = vld [vmem:[#allocation7 + $0x8] sm:$0xff]
    %v96 = vld [vmem:[#allocation7 + $0x10] sm:$0xff]
    %v97 = vld [vmem:[#allocation7 + $0x18] sm:$0xff]
    %v98 = vld [vmem:[#allocation5] sm:$0xff]
    %v99 = vld [vmem:[#allocation8] sm:$0xff]
    %v100 = vld [vmem:[#allocation8 + $0x8] sm:$0xff]
    %vm101 = vcmask 130048
    %v103 = vsel %vm101, %v98, 0
    %105 = vmatpush.msra.mxu0 0.0
    %106 = vmatpush.msra.mxu0 0.0
    %107 = vmatpush.msra.mxu0 0.0
    %108 = vmatpush.msra.mxu0 0.0
    %109 = vmatpush.msra.mxu0 0.0
    %110 = vmatpush.msra.mxu0 0.0
    %111 = vmatpush.msra.mxu0 0.0
    %112 = vmatpush.msra.mxu0 0.0
    %113 = vmatpush.msra.mxu0 0.0
    %114 = vmatpush.msra.mxu0 0.0
    %115 = vmatpush.msra.mxu0 0.0
    %116 = vmatpush.msra.mxu0 0.0
    %117 = vmatpush.msra.mxu0 0.0
    %118 = vmatpush.msra.mxu0 0.0
    %119 = vmatpush.msra.mxu0 %v100
    %120 = vmatpush.msra.mxu0 %v99
    %121 = vmatmul.f32.gmra.mxu0 %v103
    %v122 = vpop.f32.mrf.mxu0
    %v123 = vadd.f32 0.0, %v122
    %124 = vdwg.mxu0
    %vm125 = vcmask 261120
    %v127 = vsel %vm125, %v93, 0
    %129 = vmatpush.msra.mxu0 0.0
    %130 = vmatpush.msra.mxu0 0.0
    %131 = vmatpush.msra.mxu0 0.0
    %132 = vmatpush.msra.mxu0 0.0
    %133 = vmatpush.msra.mxu0 0.0
    %134 = vmatpush.msra.mxu0 0.0
    %135 = vmatpush.msra.mxu0 0.0
    %136 = vmatpush.msra.mxu0 0.0
    %137 = vmatpush.msra.mxu0 0.0
    %138 = vmatpush.msra.mxu0 0.0
    %139 = vmatpush.msra.mxu0 0.0
    %140 = vmatpush.msra.mxu0 0.0
    %141 = vmatpush.msra.mxu0 %v97
    %142 = vmatpush.msra.mxu0 %v96
    %143 = vmatpush.msra.mxu0 %v95
    %144 = vmatpush.msra.mxu0 %v94
    %145 = vmatmul.f32.gmra.mxu0 %v127
    %v146 = vpop.f32.mrf.mxu0
    %v147 = vadd.f32 %v123, %v146
    %148 = vdwg.mxu0
    %v149 = vld [vmem:[#allocation10] sm:$0x1]
    %v150 = vperm.slane %v149, 0
    %v151 = vadd.f32 %v147, %v150
    %v152 = vmax.f32 %v151, 0.0
    %vm153 = vcmask 523264
    %v154 = vsel %vm153, %v152, 0.0
    %155 = vadd.xlane.f32.xlu0 %v154
    %v156 = vpop.xlane.xlu0 %155
    %v157 = vmul.f32 %v152, %v152
    %v158 = vsel %vm153, %v157, 0.0
    %159 = vadd.xlane.f32.xlu0 %v158
    %v160 = vpop.xlane.xlu0 %159
    %v161 = vmul.f32 %v156, 0.015625
    %v162 = vmul.f32 %v160, 0.015625
    %v163 = vmul.f32 %v161, %v161
    %v164 = vsub.f32 %v162, %v163
    %v165 = vmax.f32 %v164, 0.0
    %v166 = vadd.f32 %v165, 1e-05
    %v167 = vrsqrt.pop %v166
    %v168 = vmul.f32 %v167, %v166
    %v169 = vmul.f32 %v168, %v167
    %v170 = vmul.f32 0.5, %v169
    %v171 = vsub.f32 1.5, %v170
    %v172 = vmul.f32 %v167, %v171
    %vm173 = vweird.f32 %v166
    %vm174 = vweird.f32 %v167
    %vm175 = vmor %vm173, %vm174
    %v176 = vsel %vm175, %v167, %v172
    %v177 = vsub.f32 %v152, %v161
    %v178 = vmul.f32 %v177, %v176
    %v179 = vld [vmem:[#allocation10 + $0x1] sm:$0x1]
    %v180 = vperm.slane %v179, 0
    %v181 = vmul.f32 %v178, %v180
    %v182 = vld [vmem:[#allocation10 + $0x2] sm:$0x1]
    %v183 = vperm.slane %v182, 0
    %v184 = vadd.f32 %v181, %v183
    %185 = vst.msk [vmem:[#allocation11] sm:$0xff] %vm153, %v184
    // Predicated region
    $region42: #{tpu_custom_call.1} parent=1 // pred_check
      _
    $region43: #{tpu_custom_call.1} parent=1 // pred_check_branch
      %187 = sbr.rel (0) target = $region45
    $region44: #{tpu_custom_call.1} parent=1 // pred_region
      %189 = vsyncadd [#allocation4], 0
      %s191 = sshll.u32 [#allocation11], 4
      %s192 = int_to_ptr.vmem [resolvable:$true] %s191
      %s193 = sshll.u32 %s5, 4
      %s194 = int_to_ptr.hbm [resolvable:$true] %s193
      %196 = dma.vmem_to_hbm [thread:$0]  %s192, 128, %s194, [#allocation4]
    $region45: #{tpu_custom_call.1} parent=1 // pred_fallthru
      _
    // Predicated region
    $region46: #{tpu_custom_call.1} parent=1 // pred_check
      _
    $region47: #{tpu_custom_call.1} parent=1 // pred_check_branch
      %198 = sbr.rel (0) target = $region49
    $region48: #{tpu_custom_call.1} parent=1 // pred_region
      %200 = dma.done [#allocation4], 128
    $region49: #{tpu_custom_call.1} parent=1 // pred_fallthru
      _
    %201 = vsyncpa [#allocation3], 1
    %202 = vsyncpa [#allocation6], 1
    %203 = vsyncpa [#allocation9], 1
    %204 = vsyncpa [#allocation4], 1

</llo_original>
